<compile_context>
chip_gen: v7x
topology: tpu7x:2x2x1
jax: 0.10.0
libtpu: 0.0.40
codegen_flags: <defaults>
</compile_context>

<pallas_src>
import functools

import jax
import jax.numpy as jnp
from jax.experimental import pallas as pl
from jax.experimental.pallas import tpu as pltpu


def _pick_tile(s, candidates):
    for t in candidates:
        if t <= s and s % t == 0:
            return t
    return s


# --------------------------- Stage 1: K/V projection ------------------------

def _kv_proj_kernel(x_ref, wk_ref, wv_ref, bk_ref, bv_ref, k_ref, v_ref):
    # x_ref: (1, C, Ts) f32; w*: (Co, C) bf16; b*: (Co, 1) f32
    x = x_ref[0].astype(jnp.bfloat16)

    def proj(w_ref, b_ref):
        y = jax.lax.dot_general(
            w_ref[...], x, (((1,), (0,)), ((), ())),
            preferred_element_type=jnp.float32)
        return y + b_ref[...]

    k_ref[0] = proj(wk_ref, bk_ref).astype(k_ref.dtype)
    v_ref[0] = proj(wv_ref, bv_ref).astype(v_ref.dtype)


# ------------------- Stage 2: flash attention + fused residual --------------

def _pam_attn_kernel(wq_ref, bq_ref, x_ref, k_ref, v_ref, o_ref,
                     m_scr, l_scr, q_scr, *, tk, s_valid, kv_resident):
    # wq_ref: (Cq, C) bf16; bq_ref: (Cq, 1) f32; x_ref: (1, C, Tq) f32
    # k_ref: (1, Cq, S|Tk) bf16; v_ref: (1, C, S|Tk) bf16; o_ref: (1, C, Tq) f32
    # m_scr/l_scr: (1, Tq) f32; q_scr: (Cq, Tq) bf16
    ki = pl.program_id(2)

    @pl.when(ki == 0)
    def _():
        # Fused query projection: q = Wq @ x_tile + bq, computed once per
        # (batch, q-tile) from the already-resident residual block.
        xq = x_ref[0].astype(jnp.bfloat16)
        q = jax.lax.dot_general(
            wq_ref[...], xq, (((1,), (0,)), ((), ())),
            preferred_element_type=jnp.float32) + bq_ref[...]
        q_scr[...] = q.astype(q_scr.dtype)
        m_scr[...] = jnp.full(m_scr.shape, -jnp.inf, dtype=m_scr.dtype)
        l_scr[...] = jnp.zeros(l_scr.shape, dtype=l_scr.dtype)
        o_ref[0] = jnp.zeros(o_ref.shape[1:], dtype=o_ref.dtype)

    if kv_resident:
        start = pl.multiple_of(ki * tk, 128)
        k = k_ref[0, :, pl.ds(start, tk)]          # (Cq, Tk) bf16, VMEM read
        v = v_ref[0, :, pl.ds(start, tk)]          # (C,  Tk) bf16, VMEM read
    else:
        k = k_ref[0]
        v = v_ref[0]
    q = q_scr[...]

    # Transposed score tile: s_t[j, i] = sum_c k[c, j] * q[c, i] = energy[i, j]
    s_t = jax.lax.dot_general(k, q, (((0,), (0,)), ((), ())),
                              preferred_element_type=jnp.float32)   # (Tk, Tq)

    if s_valid is not None:
        # Mask padded key positions before the online softmax.
        key_idx = jax.lax.broadcasted_iota(jnp.int32, s_t.shape, 0) + ki * tk
        s_t = jnp.where(key_idx < s_valid, s_t, -1e30)

    m_prev = m_scr[...]                                              # (1, Tq)
    m_new = jnp.maximum(m_prev, jnp.max(s_t, axis=0, keepdims=True))
    alpha = jnp.exp(m_prev - m_new)                                  # (1, Tq) f32
    # exp in bf16: logits <= 0, weights <= 1, consumed by a bf16 matmul anyway.
    p_t = jnp.exp((s_t - m_new).astype(jnp.bfloat16))                # (Tk, Tq)

    l_scr[...] = alpha * l_scr[...] + jnp.sum(
        p_t.astype(jnp.float32), axis=0, keepdims=True)
    # Accumulate un-normalized output directly into the resident output block.
    o_ref[0] = alpha * o_ref[0] + jax.lax.dot_general(
        v, p_t, (((1,), (0,)), ((), ())),
        preferred_element_type=jnp.float32)                          # (C, Tq)
    m_scr[...] = m_new

    @pl.when(ki == pl.num_programs(2) - 1)
    def _():
        inv_l = pl.reciprocal(l_scr[...], approx=True)               # (1, Tq)
        # gamma is folded into v, so: out = gamma*attn_out + x
        o_ref[0] = o_ref[0] * inv_l + x_ref[0]


# --------------------------------- Wrapper ----------------------------------

def pam_module(x, wq, bq, wk, bk, wv, bv, gamma):
    """Position attention module forward pass.

    x: (B, C, H, W, D) f32; wq/wk: (C//8, C); wv: (C, C); bq/bk/bv 1-D biases;
    gamma: scalar.
    """
    B, C, H, W, D = x.shape
    S = H * W * D
    Cq = wq.shape[0]
    gamma = jnp.asarray(gamma, jnp.float32)

    # Pad the spatial axis to a multiple of 128 (lane-dense blocks).
    S_pad = -(-S // 128) * 128
    x_flat = x.reshape(B, C, S)
    if S_pad != S:
        x_flat = jnp.pad(x_flat, ((0, 0), (0, 0), (0, S_pad - S)))

    # Fold gamma into the value projection: gamma*(V @ A^T) == (gamma*V) @ A^T
    wq_b = wq.astype(jnp.bfloat16)
    wk_b = wk.astype(jnp.bfloat16)
    wv_b = (gamma * wv).astype(jnp.bfloat16)
    bq_c = bq.reshape(Cq, 1).astype(jnp.float32)
    bk_c = bk.reshape(Cq, 1).astype(jnp.float32)
    bv_c = (gamma * bv).reshape(C, 1).astype(jnp.float32)

    # ---- tile selection -----------------------------------------------------
    ts = 128
    for t in (1024, 512, 256, 128):
        # x block (f32) + k/v outputs (bf16), double-buffered: keep well under
        # v5e's 16 MiB default scoped VMEM.
        if S_pad % t == 0 and 2 * t * (C * 4 + (Cq + C) * 2) <= 8 * 1024 * 1024:
            ts = t
            break

    tq = _pick_tile(S_pad, (512, 256, 128))
    tk = _pick_tile(S_pad, (1024, 512, 256, 128))
    # Keep >= 2 parallel grid points for v7x megacore when B == 1.
    if B * (S_pad // tq) < 2 and tq > 128:
        tq //= 2

    # ---- VMEM budget / K,V residency decision (v7x 64 MiB is the tight one) -
    kv_res_bytes = 2 * (Cq + C) * S_pad * 2          # double-buffered bf16 K+V
    tile_bytes = 2 * 2 * C * tq * 4                  # x-res in + out, 2 bufs, f32
    scr_bytes = 2 * tq * 4 + Cq * tq * 2
    w_bytes = 2 * (Cq * C * 2 + Cq * 4)
    kv_resident = (kv_res_bytes + tile_bytes + scr_bytes + w_bytes
                   <= 24 * 1024 * 1024)

    if kv_resident:
        kv_bytes = kv_res_bytes
        k_spec = pl.BlockSpec((1, Cq, S_pad), lambda b, qi, ki: (b, 0, 0))
        v_spec = pl.BlockSpec((1, C, S_pad), lambda b, qi, ki: (b, 0, 0))
    else:
        kv_bytes = 2 * (Cq + C) * tk * 2
        k_spec = pl.BlockSpec((1, Cq, tk), lambda b, qi, ki: (b, 0, ki))
        v_spec = pl.BlockSpec((1, C, tk), lambda b, qi, ki: (b, 0, ki))

    stage2_need = kv_bytes + tile_bytes + scr_bytes + w_bytes
    vmem_limit = int(min(48 * 1024 * 1024,
                         max(32 * 1024 * 1024, 2 * stage2_need)))

    # ---- Stage 1: fused key/value 1x1x1 convs (projection matmuls) ----------
    k, v = pl.pallas_call(
        _kv_proj_kernel,
        out_shape=(
            jax.ShapeDtypeStruct((B, Cq, S_pad), jnp.bfloat16),
            jax.ShapeDtypeStruct((B, C, S_pad), jnp.bfloat16),
        ),
        grid=(B, S_pad // ts),
        in_specs=[
            pl.BlockSpec((1, C, ts), lambda b, si: (b, 0, si)),
            pl.BlockSpec((Cq, C), lambda b, si: (0, 0)),
            pl.BlockSpec((C, C), lambda b, si: (0, 0)),
            pl.BlockSpec((Cq, 1), lambda b, si: (0, 0)),
            pl.BlockSpec((C, 1), lambda b, si: (0, 0)),
        ],
        out_specs=(
            pl.BlockSpec((1, Cq, ts), lambda b, si: (b, 0, si)),
            pl.BlockSpec((1, C, ts), lambda b, si: (b, 0, si)),
        ),
        compiler_params=pltpu.CompilerParams(
            dimension_semantics=("parallel", "parallel")),
    )(x_flat, wk_b, wv_b, bk_c, bv_c)

    # ---- Stage 2: flash-style position attention, fused q-proj + residual ---
    attn_kernel = functools.partial(
        _pam_attn_kernel, tk=tk,
        s_valid=(S if S_pad != S else None),
        kv_resident=kv_resident)

    out_flat = pl.pallas_call(
        attn_kernel,
        out_shape=jax.ShapeDtypeStruct((B, C, S_pad), jnp.float32),
        grid=(B, S_pad // tq, S_pad // tk),
        in_specs=[
            pl.BlockSpec((Cq, C), lambda b, qi, ki: (0, 0)),
            pl.BlockSpec((Cq, 1), lambda b, qi, ki: (0, 0)),
            pl.BlockSpec((1, C, tq), lambda b, qi, ki: (b, 0, qi)),
            k_spec,
            v_spec,
        ],
        out_specs=pl.BlockSpec((1, C, tq), lambda b, qi, ki: (b, 0, qi)),
        scratch_shapes=[
            pltpu.VMEM((1, tq), jnp.float32),      # running max
            pltpu.VMEM((1, tq), jnp.float32),      # running denominator
            pltpu.VMEM((Cq, tq), jnp.bfloat16),    # projected query tile
        ],
        compiler_params=pltpu.CompilerParams(
            dimension_semantics=("parallel", "parallel", "arbitrary"),
            vmem_limit_bytes=vmem_limit),
    )(wq_b, bq_c, x_flat, k, v)

    if S_pad != S:
        out_flat = out_flat[:, :, :S]
    return out_flat.reshape(B, C, H, W, D)


# ------------------------------- Reference ----------------------------------

def pam_module_ref(x, wq, bq, wk, bk, wv, bv, gamma):
    """Pure-JAX reference mirroring the PyTorch PAM_Module forward."""
    B, C, H, W, D = x.shape
    S = H * W * D
    xf = x.reshape(B, C, S)
    q = jnp.einsum("oc,bcs->bos", wq, xf) + bq[None, :, None]
    k = jnp.einsum("oc,bcs->bos", wk, xf) + bk[None, :, None]
    v = jnp.einsum("oc,bcs->bos", wv, xf) + bv[None, :, None]
    energy = jnp.einsum("bci,bcj->bij", q, k)              # (B, S, S)
    attn = jax.nn.softmax(energy, axis=-1)
    out = jnp.einsum("bcj,bij->bci", v, attn)              # (B, C, S)
    out = gamma * out + xf
    return out.reshape(B, C, H, W, D)


if __name__ == "__main__":
    def run_case(B, C, H, W, D):
        Cq = C // 8
        key = jax.random.PRNGKey(0)
        kx, k1, k2, k3, k4, k5, k6 = jax.random.split(key, 7)
        x = jax.random.normal(kx, (B, C, H, W, D), dtype=jnp.float32)
        wq = 0.1 * jax.random.normal(k1, (Cq, C), dtype=jnp.float32)
        bq = 0.1 * jax.random.normal(k2, (Cq,), dtype=jnp.float32)
        wk = 0.1 * jax.random.normal(k3, (Cq, C), dtype=jnp.float32)
        bk = 0.1 * jax.random.normal(k4, (Cq,), dtype=jnp.float32)
        wv = 0.1 * jax.random.normal(k5, (C, C), dtype=jnp.float32)
        bv = 0.1 * jax.random.normal(k6, (C,), dtype=jnp.float32)
        # nn.Parameter(torch.zeros(1)) initializes gamma=0; use a nonzero value
        # so the attention path is actually exercised.
        gamma = jnp.float32(0.5)

        out = jax.block_until_ready(
            pam_module(x, wq, bq, wk, bk, wv, bv, gamma))
        ref = jax.block_until_ready(
            pam_module_ref(x, wq, bq, wk, bk, wv, bv, gamma))
        assert out.shape == (B, C, H, W, D)
        assert jnp.allclose(out, ref, rtol=2e-2, atol=2e-2), \
            f"mismatch vs reference for shape {(B, C, H, W, D)}"

    run_case(2, 32, 8, 8, 8)   # S = 512 (128-aligned)
    run_case(1, 32, 5, 5, 5)   # S = 125 (exercises padding + key masking)
    print("KERNEL_OK")
</pallas_src>

<mosaic_0001>
module attributes {stable_mosaic.version = 11 : i64} {
  func.func @_kv_proj_kernel(%arg0: i32, %arg1: i32, %arg2: memref<1x32x512xf32, #tpu.memory_space<vmem>>, %arg3: memref<4x32xbf16, #tpu.memory_space<vmem>>, %arg4: memref<32x32xbf16, #tpu.memory_space<vmem>>, %arg5: memref<4x1xf32, #tpu.memory_space<vmem>>, %arg6: memref<32x1xf32, #tpu.memory_space<vmem>>, %arg7: memref<1x4x512xbf16, #tpu.memory_space<vmem>>, %arg8: memref<1x32x512xbf16, #tpu.memory_space<vmem>>) attributes {dimension_semantics = [#tpu.dimension_semantics<parallel>, #tpu.dimension_semantics<parallel>], iteration_bounds = array<i64: 2, 1>, scalar_prefetch = 0 : i64, scratch_operands = 0 : i64, tpu.core_type = #tpu.core_type<tc>, window_params = [{transform_indices = @transform_0, window_bounds = array<i64: 1, 32, 512>}, {pipeline_mode = #tpu.pipeline_mode<synchronous>, transform_indices = @transform_1, window_bounds = array<i64: 4, 32>}, {pipeline_mode = #tpu.pipeline_mode<synchronous>, transform_indices = @transform_2, window_bounds = array<i64: 32, 32>}, {pipeline_mode = #tpu.pipeline_mode<synchronous>, transform_indices = @transform_3, window_bounds = array<i64: 4, 1>}, {pipeline_mode = #tpu.pipeline_mode<synchronous>, transform_indices = @transform_4, window_bounds = array<i64: 32, 1>}, {transform_indices = @transform_5, window_bounds = array<i64: 1, 4, 512>}, {transform_indices = @transform_6, window_bounds = array<i64: 1, 32, 512>}]} {
    %c0 = arith.constant 0 : index
    %c0_0 = arith.constant 0 : index
    %c0_1 = arith.constant 0 : index
    %0 = vector.load %arg2[%c0, %c0_0, %c0_1] : memref<1x32x512xf32, #tpu.memory_space<vmem>>, vector<1x32x512xf32>
    %1 = vector.shape_cast %0 : vector<1x32x512xf32> to vector<32x512xf32>
    %2 = arith.truncf %1 : vector<32x512xf32> to vector<32x512xbf16>
    %c0_2 = arith.constant 0 : index
    %c0_3 = arith.constant 0 : index
    %3 = vector.load %arg3[%c0_2, %c0_3] : memref<4x32xbf16, #tpu.memory_space<vmem>>, vector<4x32xbf16>
    %cst = arith.constant dense<0.000000e+00> : vector<4x512xf32>
    %4 = tpu.matmul %3, %2, %cst {dimension_numbers = #tpu.dot_dimension_numbers<[1], [0], [0], [1], [0, 0, 1, 1], [], []>} : vector<4x32xbf16>, vector<32x512xbf16>, vector<4x512xf32> -> vector<4x512xf32>
    %c0_4 = arith.constant 0 : index
    %c0_5 = arith.constant 0 : index
    %5 = vector.load %arg5[%c0_4, %c0_5] : memref<4x1xf32, #tpu.memory_space<vmem>>, vector<4x1xf32>
    %6 = vector.broadcast %5 : vector<4x1xf32> to vector<4x512xf32>
    %7 = arith.addf %4, %6 : vector<4x512xf32>
    %8 = arith.truncf %7 : vector<4x512xf32> to vector<4x512xbf16>
    %c0_6 = arith.constant 0 : index
    %c0_7 = arith.constant 0 : index
    %c0_8 = arith.constant 0 : index
    %9 = vector.load %arg7[%c0_6, %c0_7, %c0_8] : memref<1x4x512xbf16, #tpu.memory_space<vmem>>, vector<1x4x512xbf16>
    %10 = vector.shape_cast %9 : vector<1x4x512xbf16> to vector<4x512xbf16>
    %11 = vector.shape_cast %8 : vector<4x512xbf16> to vector<1x4x512xbf16>
    tpu.vector_store %arg7[%c0_6, %c0_7, %c0_8], %11 {strides = array<i32>} : memref<1x4x512xbf16, #tpu.memory_space<vmem>>, vector<1x4x512xbf16>,
    %c0_9 = arith.constant 0 : index
    %c0_10 = arith.constant 0 : index
    %12 = vector.load %arg4[%c0_9, %c0_10] : memref<32x32xbf16, #tpu.memory_space<vmem>>, vector<32x32xbf16>
    %cst_11 = arith.constant dense<0.000000e+00> : vector<32x512xf32>
    %13 = tpu.matmul %12, %2, %cst_11 {dimension_numbers = #tpu.dot_dimension_numbers<[1], [0], [0], [1], [0, 0, 1, 1], [], []>} : vector<32x32xbf16>, vector<32x512xbf16>, vector<32x512xf32> -> vector<32x512xf32>
    %c0_12 = arith.constant 0 : index
    %c0_13 = arith.constant 0 : index
    %14 = vector.load %arg6[%c0_12, %c0_13] : memref<32x1xf32, #tpu.memory_space<vmem>>, vector<32x1xf32>
    %15 = vector.broadcast %14 : vector<32x1xf32> to vector<32x512xf32>
    %16 = arith.addf %13, %15 : vector<32x512xf32>
    %17 = arith.truncf %16 : vector<32x512xf32> to vector<32x512xbf16>
    %c0_14 = arith.constant 0 : index
    %c0_15 = arith.constant 0 : index
    %c0_16 = arith.constant 0 : index
    %18 = vector.load %arg8[%c0_14, %c0_15, %c0_16] : memref<1x32x512xbf16, #tpu.memory_space<vmem>>, vector<1x32x512xbf16>
    %19 = vector.shape_cast %18 : vector<1x32x512xbf16> to vector<32x512xbf16>
    %20 = vector.shape_cast %17 : vector<32x512xbf16> to vector<1x32x512xbf16>
    tpu.vector_store %arg8[%c0_14, %c0_15, %c0_16], %20 {strides = array<i32>} : memref<1x32x512xbf16, #tpu.memory_space<vmem>>, vector<1x32x512xbf16>,
    return
  }
  func.func @transform_0(%arg0: i32, %arg1: i32) -> (i32, i32, i32) {
    %c0_i32 = arith.constant 0 : i32
    %c0_i32_0 = arith.constant 0 : i32
    return %arg0, %c0_i32, %arg1 : i32, i32, i32
  }
  func.func @transform_1(%arg0: i32, %arg1: i32) -> (i32, i32) {
    %c0_i32 = arith.constant 0 : i32
    %c0_i32_0 = arith.constant 0 : i32
    %c0_i32_1 = arith.constant 0 : i32
    return %c0_i32, %c0_i32_0 : i32, i32
  }
  func.func @transform_2(%arg0: i32, %arg1: i32) -> (i32, i32) {
    %c0_i32 = arith.constant 0 : i32
    %c0_i32_0 = arith.constant 0 : i32
    %c0_i32_1 = arith.constant 0 : i32
    return %c0_i32, %c0_i32_0 : i32, i32
  }
  func.func @transform_3(%arg0: i32, %arg1: i32) -> (i32, i32) {
    %c0_i32 = arith.constant 0 : i32
    %c0_i32_0 = arith.constant 0 : i32
    %c0_i32_1 = arith.constant 0 : i32
    return %c0_i32, %c0_i32_0 : i32, i32
  }
  func.func @transform_4(%arg0: i32, %arg1: i32) -> (i32, i32) {
    %c0_i32 = arith.constant 0 : i32
    %c0_i32_0 = arith.constant 0 : i32
    %c0_i32_1 = arith.constant 0 : i32
    return %c0_i32, %c0_i32_0 : i32, i32
  }
  func.func @transform_5(%arg0: i32, %arg1: i32) -> (i32, i32, i32) {
    %c0_i32 = arith.constant 0 : i32
    %c0_i32_0 = arith.constant 0 : i32
    return %arg0, %c0_i32, %arg1 : i32, i32, i32
  }
  func.func @transform_6(%arg0: i32, %arg1: i32) -> (i32, i32, i32) {
    %c0_i32 = arith.constant 0 : i32
    %c0_i32_0 = arith.constant 0 : i32
    return %arg0, %c0_i32, %arg1 : i32, i32, i32
  }
}

</mosaic_0001>

<llo_original>
// kernel: tpu_custom_call.1
$region0: #{tpu_custom_call.1}
  #allocation0 [shape = 'u32[]', space=smem, size = 0x4, offset = 0x4, fixed_abs, tag = 'smem constant byte address 0x4 - core index']
  #allocation1 [shape = 'u32[144,128]{1,0:T(1,128)}', space=vmem, size = 0x12000, scoped, tag = 'internal scratch']
  %s0 = inlined_call_operand.hbm [shape: f32[2,32,512], index: 0, kind: input, shape index: {}]
  %s1 = inlined_call_operand.vmem [shape: bf16[4,32], index: 1, kind: input, shape index: {}]
  %s2 = inlined_call_operand.vmem [shape: bf16[32,32], index: 2, kind: input, shape index: {}]
  %s3 = inlined_call_operand.vmem [shape: f32[4,1], index: 3, kind: input, shape index: {}]
  %s4 = inlined_call_operand.vmem [shape: f32[32,1], index: 4, kind: input, shape index: {}]
  %s5 = inlined_call_operand.hbm [shape: bf16[2,4,512], index: 5, kind: output, shape index: {0}]
  %s6 = inlined_call_operand.hbm [shape: bf16[2,32,512], index: 6, kind: output, shape index: {1}]
  %7 = xla_tuple %s5, %s6
  %s8 = sld [smem:[#allocation0]]
  $region65: #{tpu_custom_call.1} parent=0
    _
  %s10 = ssub.s32 1, %s8
  %s11 = scalar_select 0, %s10, %s8
  $region1: #{tpu_custom_call.1} parent=0
    #allocation2 [shape = 'u8[131072]{0}', space=vmem, size = 0x20000, scoped, tag = 'input window, operand 0']
    #allocation3 [shape = 's32[2]{0}', space=sflag, size = 0x8, scoped, tag = 'scoped memory for tpu_custom_call.1']
    #allocation4 [shape = 's32[2]{0}', space=sflag, size = 0x8, scoped, tag = 'scoped memory for tpu_custom_call.1']
    #allocation5 [shape = 'u8[8192]{0}', space=vmem, size = 0x2000, scoped, tag = 'output window, operand 0']
    #allocation6 [shape = 'u8[65536]{0}', space=vmem, size = 0x10000, scoped, tag = 'output window, operand 1']
    #allocation7 [shape = 's32[2]{0}', space=sflag, size = 0x8, scoped, tag = 'scoped memory for tpu_custom_call.1']
    %12 = vsyncpa [#allocation3], 0
    %s13 = scalar_lea.sflag [#allocation3], 1
    %14 = vsyncpa %s13, 0
    %15 = vsyncpa [#allocation4], 0
    %s16 = scalar_lea.sflag [#allocation4], 1
    %17 = vsyncpa %s16, 0
    %18 = vsyncpa [#allocation7], 0
    %s19 = scalar_lea.sflag [#allocation7], 1
    %20 = vsyncpa %s19, 0
    loop: start=0, step=1, limit=4
    $region2: #{tpu_custom_call.1} parent=1 // loop_pre_header
      _
    $region3: #{tpu_custom_call.1} parent=1 // loop_header
      %s22 = sphi 0, %s26
      %p23 = scmp.ge.s32.totalorder %s22, 4
      %s29 = sphi 0, %s41
      %s30 = sphi 0, %s37
      %s31 = sphi 0, %s29
      %s32 = sphi 0, %s30
      %s33 = sphi 0, %s31
      %s34 = sphi 0, %s32
      %s46 = sphi 0, %s48
      %s49 = sphi 0, %s46
      %s50 = sphi 0, %s49
      %s66 = sphi 0, %s50
      %s70 = sphi 0, %s70
      %s72 = sphi 0, %s70
      %s73 = sphi 0, %s72
      %s87 = sphi 0, %s73
      %s91 = sphi 0, %s91
      %s93 = sphi 0, %s91
      %s94 = sphi 0, %s93
      %s108 = sphi 0, %s94
      %s112 = sphi 0, %s112
      %s114 = sphi 0, %s112
      %s115 = sphi 0, %s114
      %s129 = sphi 0, %s115
      %s133 = sphi 0, %s133
      %s135 = sphi 0, %s133
      %s136 = sphi 0, %s135
      %s150 = sphi 0, %s136
      %s158 = sphi 0, %s160
      %s161 = sphi 0, %s158
      %s162 = sphi 0, %s161
      %s178 = sphi 0, %s162
      %s186 = sphi 0, %s188
      %s189 = sphi 0, %s186
      %s190 = sphi 0, %s189
      %s206 = sphi 0, %s190
    $region4: #{tpu_custom_call.1} parent=1 // loop_header_branch
      %25 = sbr.rel (%p23) target = $region8
    $region5: #{tpu_custom_call.1} parent=1 // loop_body
      %s27 = ssub.s32 %s22, 1
      %s28 = ssub.s32 %s22, 2
      %s35 = sadd.s32 1, %s30
      %p36 = scmp.ge.s32.totalorder %s35, 1
      %s37 = scalar_select %p36, 0, %s35
      %s38 = sadd.s32 1, %s29
      %s39 = scalar_select %p36, %s38, %s29
      %p40 = scmp.ge.s32.totalorder %s39, 2
      %s41 = scalar_select %p40, 0, %s39
      %s42 = ssub.s32 %s29, %s41
      %s43 = ssub.s32 %s30, %s37
      %s44 = sor.u32 %s42, %s43
      %p45 = scmp.eq.s32.totalorder %s44, 0
      %s47 = sadd.s32 %s46, 1
      %s48 = scalar_select %p45, %s46, %s47
      %p51 = pneg %p45
      %p52 = scmp.eq.s32.totalorder %s22, 1
      %p53 = por %p51, %p52
      %p54 = scmp.ne.s32.totalorder %s46, %s49
      %p55 = scmp.eq.s32.totalorder %s22, 0
      %p56 = por %p54, %p55
      %p57 = scmp.ne.s32.totalorder %s46, %s49
      %p58 = scmp.eq.s32.totalorder %s27, 1
      %p59 = por %p57, %p58
      %p60 = scmp.ne.s32.totalorder %s49, %s50
      %p61 = scmp.eq.s32.totalorder %s27, 0
      %p62 = por %p60, %p61
      %p63 = scmp.ne.s32.totalorder %s49, %s50
      %p64 = scmp.eq.s32.totalorder %s28, 1
      %p65 = por %p63, %p64
      %p67 = scmp.ne.s32.totalorder %s50, %s66
      %p68 = scmp.eq.s32.totalorder %s28, 0
      %p69 = por %p67, %p68
      %s71 = sadd.s32 %s70, 1
      %p74 = scmp.eq.s32.totalorder %s22, 1
      %p75 = scmp.ne.s32.totalorder %s70, %s72
      %p76 = scmp.eq.s32.totalorder %s22, 0
      %p77 = por %p75, %p76
      %p78 = scmp.ne.s32.totalorder %s70, %s72
      %p79 = scmp.eq.s32.totalorder %s27, 1
      %p80 = por %p78, %p79
      %p81 = scmp.ne.s32.totalorder %s72, %s73
      %p82 = scmp.eq.s32.totalorder %s27, 0
      %p83 = por %p81, %p82
      %p84 = scmp.ne.s32.totalorder %s72, %s73
      %p85 = scmp.eq.s32.totalorder %s28, 1
      %p86 = por %p84, %p85
      %p88 = scmp.ne.s32.totalorder %s73, %s87
      %p89 = scmp.eq.s32.totalorder %s28, 0
      %p90 = por %p88, %p89
      %s92 = sadd.s32 %s91, 1
      %p95 = scmp.eq.s32.totalorder %s22, 1
      %p96 = scmp.ne.s32.totalorder %s91, %s93
      %p97 = scmp.eq.s32.totalorder %s22, 0
      %p98 = por %p96, %p97
      %p99 = scmp.ne.s32.totalorder %s91, %s93
      %p100 = scmp.eq.s32.totalorder %s27, 1
      %p101 = por %p99, %p100
      %p102 = scmp.ne.s32.totalorder %s93, %s94
      %p103 = scmp.eq.s32.totalorder %s27, 0
      %p104 = por %p102, %p103
      %p105 = scmp.ne.s32.totalorder %s93, %s94
      %p106 = scmp.eq.s32.totalorder %s28, 1
      %p107 = por %p105, %p106
      %p109 = scmp.ne.s32.totalorder %s94, %s108
      %p110 = scmp.eq.s32.totalorder %s28, 0
      %p111 = por %p109, %p110
      %s113 = sadd.s32 %s112, 1
      %p116 = scmp.eq.s32.totalorder %s22, 1
      %p117 = scmp.ne.s32.totalorder %s112, %s114
      %p118 = scmp.eq.s32.totalorder %s22, 0
      %p119 = por %p117, %p118
      %p120 = scmp.ne.s32.totalorder %s112, %s114
      %p121 = scmp.eq.s32.totalorder %s27, 1
      %p122 = por %p120, %p121
      %p123 = scmp.ne.s32.totalorder %s114, %s115
      %p124 = scmp.eq.s32.totalorder %s27, 0
      %p125 = por %p123, %p124
      %p126 = scmp.ne.s32.totalorder %s114, %s115
      %p127 = scmp.eq.s32.totalorder %s28, 1
      %p128 = por %p126, %p127
      %p130 = scmp.ne.s32.totalorder %s115, %s129
      %p131 = scmp.eq.s32.totalorder %s28, 0
      %p132 = por %p130, %p131
      %s134 = sadd.s32 %s133, 1
      %p137 = scmp.eq.s32.totalorder %s22, 1
      %p138 = scmp.ne.s32.totalorder %s133, %s135
      %p139 = scmp.eq.s32.totalorder %s22, 0
      %p140 = por %p138, %p139
      %p141 = scmp.ne.s32.totalorder %s133, %s135
      %p142 = scmp.eq.s32.totalorder %s27, 1
      %p143 = por %p141, %p142
      %p144 = scmp.ne.s32.totalorder %s135, %s136
      %p145 = scmp.eq.s32.totalorder %s27, 0
      %p146 = por %p144, %p145
      %p147 = scmp.ne.s32.totalorder %s135, %s136
      %p148 = scmp.eq.s32.totalorder %s28, 1
      %p149 = por %p147, %p148
      %p151 = scmp.ne.s32.totalorder %s136, %s150
      %p152 = scmp.eq.s32.totalorder %s28, 0
      %p153 = por %p151, %p152
      %s154 = ssub.s32 %s29, %s41
      %s155 = ssub.s32 %s30, %s37
      %s156 = sor.u32 %s154, %s155
      %p157 = scmp.eq.s32.totalorder %s156, 0
      %s159 = sadd.s32 %s158, 1
      %s160 = scalar_select %p157, %s158, %s159
      %p163 = pneg %p157
      %p164 = scmp.eq.s32.totalorder %s22, 1
      %p165 = por %p163, %p164
      %p166 = scmp.ne.s32.totalorder %s158, %s161
      %p167 = scmp.eq.s32.totalorder %s22, 0
      %p168 = por %p166, %p167
      %p169 = scmp.ne.s32.totalorder %s158, %s161
      %p170 = scmp.eq.s32.totalorder %s27, 1
      %p171 = por %p169, %p170
      %p172 = scmp.ne.s32.totalorder %s161, %s162
      %p173 = scmp.eq.s32.totalorder %s27, 0
      %p174 = por %p172, %p173
      %p175 = scmp.ne.s32.totalorder %s161, %s162
      %p176 = scmp.eq.s32.totalorder %s28, 1
      %p177 = por %p175, %p176
      %p179 = scmp.ne.s32.totalorder %s162, %s178
      %p180 = scmp.eq.s32.totalorder %s28, 0
      %p181 = por %p179, %p180
      %s182 = ssub.s32 %s29, %s41
      %s183 = ssub.s32 %s30, %s37
      %s184 = sor.u32 %s182, %s183
      %p185 = scmp.eq.s32.totalorder %s184, 0
      %s187 = sadd.s32 %s186, 1
      %s188 = scalar_select %p185, %s186, %s187
      %p191 = pneg %p185
      %p192 = scmp.eq.s32.totalorder %s22, 1
      %p193 = por %p191, %p192
      %p194 = scmp.ne.s32.totalorder %s186, %s189
      %p195 = scmp.eq.s32.totalorder %s22, 0
      %p196 = por %p194, %p195
      %p197 = scmp.ne.s32.totalorder %s186, %s189
      %p198 = scmp.eq.s32.totalorder %s27, 1
      %p199 = por %p197, %p198
      %p200 = scmp.ne.s32.totalorder %s189, %s190
      %p201 = scmp.eq.s32.totalorder %s27, 0
      %p202 = por %p200, %p201
      %p203 = scmp.ne.s32.totalorder %s189, %s190
      %p204 = scmp.eq.s32.totalorder %s28, 1
      %p205 = por %p203, %p204
      %p207 = scmp.ne.s32.totalorder %s190, %s206
      %p208 = scmp.eq.s32.totalorder %s28, 0
      %p209 = por %p207, %p208
      %p210 = scmp.le.s32.totalorder 1, %s22
      %p211 = scmp.lt.s32.totalorder %s22, 3
      %p212 = pnand %p210, %p211
      %p213 = pneg %p212
      // Predicated region
      $region9: #{tpu_custom_call.1} parent=5 // pred_check
        _
      $region10: #{tpu_custom_call.1} parent=5 // pred_check_branch
        %215 = sbr.rel (%p212) target = $region12
      $region11: #{tpu_custom_call.1} parent=5 // pred_region
        %s216 = ssub.s32 %s22, 1
        // Predicated region
        $region13: #{tpu_custom_call.1} parent=11 // pred_check
          %p217 = pneg %p83
        $region14: #{tpu_custom_call.1} parent=11 // pred_check_branch
          %219 = sbr.rel (%p217) target = $region16
        $region15: #{tpu_custom_call.1} parent=11 // pred_region
          _
        $region16: #{tpu_custom_call.1} parent=11 // pred_fallthru
          _
        // Predicated region
        $region17: #{tpu_custom_call.1} parent=11 // pred_check
          %p220 = pneg %p104
        $region18: #{tpu_custom_call.1} parent=11 // pred_check_branch
          %222 = sbr.rel (%p220) target = $region20
        $region19: #{tpu_custom_call.1} parent=11 // pred_region
          _
        $region20: #{tpu_custom_call.1} parent=11 // pred_fallthru
          _
        // Predicated region
        $region21: #{tpu_custom_call.1} parent=11 // pred_check
          %p223 = pneg %p125
        $region22: #{tpu_custom_call.1} parent=11 // pred_check_branch
          %225 = sbr.rel (%p223) target = $region24
        $region23: #{tpu_custom_call.1} parent=11 // pred_region
          _
        $region24: #{tpu_custom_call.1} parent=11 // pred_fallthru
          _
        // Predicated region
        $region25: #{tpu_custom_call.1} parent=11 // pred_check
          %p226 = pneg %p146
        $region26: #{tpu_custom_call.1} parent=11 // pred_check_branch
          %228 = sbr.rel (%p226) target = $region28
        $region27: #{tpu_custom_call.1} parent=11 // pred_region
          _
        $region28: #{tpu_custom_call.1} parent=11 // pred_fallthru
          _
      $region12: #{tpu_custom_call.1} parent=5 // pred_fallthru
        _
      %p229 = scmp.lt.s32.totalorder %s22, 2
      // Predicated region
      $region29: #{tpu_custom_call.1} parent=5 // pred_check
        %p230 = pneg %p229
      $region30: #{tpu_custom_call.1} parent=5 // pred_check_branch
        %232 = sbr.rel (%p230) target = $region32
      $region31: #{tpu_custom_call.1} parent=5 // pred_region
        // Predicated region
        $region33: #{tpu_custom_call.1} parent=31 // pred_check
          %p233 = pneg %p56
        $region34: #{tpu_custom_call.1} parent=31 // pred_check_branch
          %235 = sbr.rel (%p233) target = $region36
        $region35: #{tpu_custom_call.1} parent=31 // pred_region
          %s236 = sand.u32 %s46, 1
          %s237 = scalar_lea.sflag [#allocation3], %s236
          %s238 = sand.u32 %s46, 1
          %s239 = smul.addr %s238, 128
          %s240 = scalar_lea.vmem [#allocation2], %s239
          %s241 = smul.u32 4, %s30
          %s243 = ssub.s32 2048, 2048
          %244 = vsyncadd %s237, %s243
          %s245 = smul.addr %s29, 16
          %s246 = sadd.s32 %s241, %s245
          %s247 = smul.addr %s246, 128
          %s248 = scalar_lea.hbm %s0, %s247
          %s249 = sshll.u32 %s240, 4
          %s250 = int_to_ptr.vmem [resolvable:$true] %s249
          %255 = dma.hbm_to_vmem [thread:$0]  %s248, 2048, %s250, %s237, 512, 512, 32
        $region36: #{tpu_custom_call.1} parent=31 // pred_fallthru
          _
      $region32: #{tpu_custom_call.1} parent=5 // pred_fallthru
        _
      %p256 = scmp.le.s32.totalorder 1, %s22
      %p257 = scmp.lt.s32.totalorder %s22, 3
      %p258 = pnand %p256, %p257
      %p259 = pneg %p258
      // Predicated region
      $region37: #{tpu_custom_call.1} parent=5 // pred_check
        _
      $region38: #{tpu_custom_call.1} parent=5 // pred_check_branch
        %261 = sbr.rel (%p258) target = $region40
      $region39: #{tpu_custom_call.1} parent=5 // pred_region
        %s262 = ssub.s32 %s22, 1
        %s263 = sand.u32 %s49, 1
        %s264 = scalar_lea.sflag [#allocation3], %s263
        %s265 = sand.u32 %s49, 1
        %s266 = smul.addr %s265, 128
        %s267 = scalar_lea.vmem [#allocation2], %s266
        // Predicated region
        $region41: #{tpu_custom_call.1} parent=39 // pred_check
          %p268 = pneg %p62
        $region42: #{tpu_custom_call.1} parent=39 // pred_check_branch
          %270 = sbr.rel (%p268) target = $region44
        $region43: #{tpu_custom_call.1} parent=39 // pred_region
          %271 = dma.done %s264, 2048
        $region44: #{tpu_custom_call.1} parent=39 // pred_fallthru
          _
        %s272 = sand.u32 %s49, 1
        %s273 = scalar_lea.sflag [#allocation3], %s272
        %s274 = sand.u32 %s49, 1
        %s275 = smul.addr %s274, 128
        %s276 = scalar_lea.vmem [#allocation2], %s275
        %p277 = pneg %p62
        %p278 = pneg %p59
        %p279 = pneg %p83
        %p280 = pneg %p80
        %p281 = pneg %p104
        %p282 = pneg %p101
        %p283 = pneg %p125
        %p284 = pneg %p122
        %p285 = pneg %p146
        %p286 = pneg %p143
        %p287 = pneg %p174
        %p288 = pneg %p171
        %s289 = sand.u32 %s161, 1
        %s290 = scalar_lea.sflag [#allocation4], %s289
        %s291 = sand.u32 %s161, 1
        %s292 = smul.addr %s291, 8
        %s293 = scalar_lea.vmem [#allocation5], %s292
        %p294 = pneg %p202
        %p295 = pneg %p199
        %s296 = sand.u32 %s189, 1
        %s297 = scalar_lea.sflag [#allocation7], %s296
        %s298 = sand.u32 %s189, 1
        %s299 = smul.addr %s298, 64
        %s300 = scalar_lea.vmem [#allocation6], %s299
        %s301 = smul.u32 4, %s32
        %s302 = smul.u32 4, %s32
        %s303 = smul.u32 4, %s32
        %v305 = vld [vmem:[%s267] sm:$0xff]
        %v306 = vld [vmem:[%s267 + $0x8] sm:$0xff]
        %v307 = vld [vmem:[%s267 + $0x10] sm:$0xff]
        %v308 = vld [vmem:[%s267 + $0x18] sm:$0xff]
        %v309 = vld [vmem:[%s267 + $0x20] sm:$0xff]
        %v310 = vld [vmem:[%s267 + $0x28] sm:$0xff]
        %v311 = vld [vmem:[%s267 + $0x30] sm:$0xff]
        %v312 = vld [vmem:[%s267 + $0x38] sm:$0xff]
        %v313 = vld [vmem:[%s267 + $0x40] sm:$0xff]
        %v314 = vld [vmem:[%s267 + $0x48] sm:$0xff]
        %v315 = vld [vmem:[%s267 + $0x50] sm:$0xff]
        %v316 = vld [vmem:[%s267 + $0x58] sm:$0xff]
        %v317 = vld [vmem:[%s267 + $0x60] sm:$0xff]
        %v318 = vld [vmem:[%s267 + $0x68] sm:$0xff]
        %v319 = vld [vmem:[%s267 + $0x70] sm:$0xff]
        %v320 = vld [vmem:[%s267 + $0x78] sm:$0xff]
        %v321 = vpack.c.bf16 %v309, %v305
        %v322 = vpack.c.bf16 %v310, %v306
        %v323 = vpack.c.bf16 %v311, %v307
        %v324 = vpack.c.bf16 %v312, %v308
        %v325 = vpack.c.bf16 %v317, %v313
        %v326 = vpack.c.bf16 %v318, %v314
        %v327 = vpack.c.bf16 %v319, %v315
        %v328 = vpack.c.bf16 %v320, %v316
        %v329 = vld [vmem:[%s1] sm:$0x3]
        %v330 = vld [vmem:[%s3] sm:$0xf]
        %332 = vset.pattern.permute.xlu0 0
        %333 = vperm.xlu0 %332, %v330
        %v334 = vpop.permute.xlu0 %333
        %vm336 = vcmask 261120
        %v338 = vsel %vm336, %v329, 0
        %340 = vmatprep.subr.bf16.mxu0 %v322
        %341 = vmatpush1.bf16.msra.mxu0 %v321
        %342 = vmatprep.subr.bf16.mxu0 %v326
        %343 = vmatpush1.bf16.msra.mxu0 %v325
        %344 = vmatprep.subr.bf16.mxu0 0
        %345 = vmatpush1.bf16.msra.mxu0 0
        %346 = vmatprep.subr.bf16.mxu0 0
        %347 = vmatpush1.bf16.msra.mxu0 0
        %348 = vmatprep.subr.bf16.mxu0 0
        %349 = vmatpush1.bf16.msra.mxu0 0
        %350 = vmatprep.subr.bf16.mxu0 0
        %351 = vmatpush1.bf16.msra.mxu0 0
        %352 = vmatprep.subr.bf16.mxu0 0
        %353 = vmatpush1.bf16.msra.mxu0 0
        %354 = vmatprep.subr.bf16.mxu0 0
        %355 = vmatpush1.bf16.msra.mxu0 0
        %356 = vmatprep.subr.bf16.mxu0 0
        %357 = vmatpush1.bf16.msra.mxu0 0
        %358 = vmatprep.subr.bf16.mxu0 0
        %359 = vmatpush1.bf16.msra.mxu0 0
        %360 = vmatprep.subr.bf16.mxu0 0
        %361 = vmatpush1.bf16.msra.mxu0 0
        %362 = vmatprep.subr.bf16.mxu0 0
        %363 = vmatpush1.bf16.msra.mxu0 0
        %364 = vmatprep.subr.bf16.mxu0 0
        %365 = vmatpush1.bf16.msra.mxu0 0
        %366 = vmatprep.subr.bf16.mxu0 0
        %367 = vmatpush1.bf16.msra.mxu0 0
        %368 = vmatprep.subr.bf16.mxu0 0
        %369 = vmatpush1.bf16.msra.mxu0 0
        %370 = vmatprep.subr.bf16.mxu0 0
        %371 = vmatpush1.bf16.msra.mxu0 0
        %372 = vmatprep.mubr.bf16.mxu0 0
        %373 = vmatmul.mubr.bf16.gmra.mrb[0].mxu0 %v338
        %v374 = vpop.f32.mrb[0].mxu0
        %v375 = vadd.f32 %v334, %v374
        %v376 = vpop.f32.mrb[0].mxu0
        %v377 = vadd.f32 %v334, %v376
        %v378 = vpop.f32.mrb[0].mxu0
        %v379 = vpop.f32.mrb[0].mxu0
        %380 = vdwg.mxu0
        %381 = vmatprep.subr.bf16.mxu0 %v324
        %382 = vmatpush1.bf16.msra.mxu0 %v323
        %383 = vmatprep.subr.bf16.mxu0 %v328
        %384 = vmatpush1.bf16.msra.mxu0 %v327
        %385 = vmatprep.subr.bf16.mxu0 0
        %386 = vmatpush1.bf16.msra.mxu0 0
        %387 = vmatprep.subr.bf16.mxu0 0
        %388 = vmatpush1.bf16.msra.mxu0 0
        %389 = vmatprep.subr.bf16.mxu0 0
        %390 = vmatpush1.bf16.msra.mxu0 0
        %391 = vmatprep.subr.bf16.mxu0 0
        %392 = vmatpush1.bf16.msra.mxu0 0
        %393 = vmatprep.subr.bf16.mxu0 0
        %394 = vmatpush1.bf16.msra.mxu0 0
        %395 = vmatprep.subr.bf16.mxu0 0
        %396 = vmatpush1.bf16.msra.mxu0 0
        %397 = vmatprep.subr.bf16.mxu0 0
        %398 = vmatpush1.bf16.msra.mxu0 0
        %399 = vmatprep.subr.bf16.mxu0 0
        %400 = vmatpush1.bf16.msra.mxu0 0
        %401 = vmatprep.subr.bf16.mxu0 0
        %402 = vmatpush1.bf16.msra.mxu0 0
        %403 = vmatprep.subr.bf16.mxu0 0
        %404 = vmatpush1.bf16.msra.mxu0 0
        %405 = vmatprep.subr.bf16.mxu0 0
        %406 = vmatpush1.bf16.msra.mxu0 0
        %407 = vmatprep.subr.bf16.mxu0 0
        %408 = vmatpush1.bf16.msra.mxu0 0
        %409 = vmatprep.subr.bf16.mxu0 0
        %410 = vmatpush1.bf16.msra.mxu0 0
        %411 = vmatprep.subr.bf16.mxu0 0
        %412 = vmatpush1.bf16.msra.mxu0 0
        %413 = vmatprep.mubr.bf16.mxu0 0
        %414 = vmatmul.mubr.bf16.gmra.mrb[0].mxu0 %v338
        %v415 = vpop.f32.mrb[0].mxu0
        %v416 = vadd.f32 %v334, %v415
        %v417 = vpop.f32.mrb[0].mxu0
        %v418 = vadd.f32 %v334, %v417
        %v419 = vpop.f32.mrb[0].mxu0
        %v420 = vpop.f32.mrb[0].mxu0
        %421 = vdwg.mxu0
        %v422 = vpack.c.bf16 %v375, %v375
        %v423 = vpack.c.bf16 %v377, %v377
        %v424 = vpack.c.bf16 %v416, %v416
        %v425 = vpack.c.bf16 %v418, %v418
        %v430 = vcombine.low %v422, %v423
        %v431 = vcombine.low %v424, %v425
        %v433 = vunpack.c.l.s4 1983009808
        %v434 = vunpack.c.0.s8 %v433
        %v435 = vlaneseq
        %v436 = vshrl.u32 %v435, 7
        %v437 = vsub.s32 %v434, %v436
        %v438 = vrot.slane %v430, %v437
        %v440 = vunpack.c.l.s4 1983009808
        %v441 = vunpack.c.0.s8 %v440
        %v442 = vlaneseq
        %v443 = vshrl.u32 %v442, 7
        %v444 = vsub.s32 %v441, %v443
        %v445 = vrot.slane %v431, %v444
        %v446 = vcombine.low %v438, %v445
        %448 = vst [vmem:[%s293] sm:$0xff] %v446
        %v449 = vld [vmem:[%s2] sm:$0xf]
        %v450 = vld [vmem:[%s2 + $0x4] sm:$0xf]
        %v451 = vld [vmem:[%s2 + $0x8] sm:$0xf]
        %v452 = vld [vmem:[%s2 + $0xc] sm:$0xf]
        %v453 = vld [vmem:[%s4] sm:$0xff]
        %v454 = vld [vmem:[%s4 + $0x8] sm:$0xff]
        %v455 = vld [vmem:[%s4 + $0x10] sm:$0xff]
        %v456 = vld [vmem:[%s4 + $0x18] sm:$0xff]
        %458 = vset.pattern.permute.xlu0 0
        %459 = vperm.xlu0 %458, %v453
        %v460 = vpop.permute.xlu0 %459
        %463 = vset.pattern.permute.xlu0 0
        %464 = vperm.xlu0 %463, %v454
        %v465 = vpop.permute.xlu0 %464
        %468 = vset.pattern.permute.xlu0 0
        %469 = vperm.xlu0 %468, %v455
        %v470 = vpop.permute.xlu0 %469
        %473 = vset.pattern.permute.xlu0 0
        %474 = vperm.xlu0 %473, %v456
        %v475 = vpop.permute.xlu0 %474
        %v481 = vunpack.c.l.b16 %v449
        %v482 = vunpack.c.l.b16 %v450
        %v483 = vunpack.c.l.b16 %v451
        %v484 = vunpack.c.l.b16 %v452
        %v485 = vpack.c.b16 %v482, %v481
        %v486 = vpack.c.b16 %v484, %v483
        %v488 = vsel %vm336, %v485, 0
        %v491 = vsel %vm336, %v486, 0
        %493 = vmatprep.subr.bf16.mxu0 %v322
        %494 = vmatpush1.bf16.msra.mxu0 %v321
        %495 = vmatprep.subr.bf16.mxu0 %v326
        %496 = vmatpush1.bf16.msra.mxu0 %v325
        %497 = vmatprep.subr.bf16.mxu0 0
        %498 = vmatpush1.bf16.msra.mxu0 0
        %499 = vmatprep.subr.bf16.mxu0 0
        %500 = vmatpush1.bf16.msra.mxu0 0
        %501 = vmatprep.subr.bf16.mxu0 0
        %502 = vmatpush1.bf16.msra.mxu0 0
        %503 = vmatprep.subr.bf16.mxu0 0
        %504 = vmatpush1.bf16.msra.mxu0 0
        %505 = vmatprep.subr.bf16.mxu0 0
        %506 = vmatpush1.bf16.msra.mxu0 0
        %507 = vmatprep.subr.bf16.mxu0 0
        %508 = vmatpush1.bf16.msra.mxu0 0
        %509 = vmatprep.subr.bf16.mxu0 0
        %510 = vmatpush1.bf16.msra.mxu0 0
        %511 = vmatprep.subr.bf16.mxu0 0
        %512 = vmatpush1.bf16.msra.mxu0 0
        %513 = vmatprep.subr.bf16.mxu0 0
        %514 = vmatpush1.bf16.msra.mxu0 0
        %515 = vmatprep.subr.bf16.mxu0 0
        %516 = vmatpush1.bf16.msra.mxu0 0
        %517 = vmatprep.subr.bf16.mxu0 0
        %518 = vmatpush1.bf16.msra.mxu0 0
        %519 = vmatprep.subr.bf16.mxu0 0
        %520 = vmatpush1.bf16.msra.mxu0 0
        %521 = vmatprep.subr.bf16.mxu0 0
        %522 = vmatpush1.bf16.msra.mxu0 0
        %523 = vmatprep.subr.bf16.mxu0 0
        %524 = vmatpush1.bf16.msra.mxu0 0
        %525 = vmatprep.mubr.bf16.mxu0 0
        %526 = vmatmul.mubr.bf16.gmra.mrb[0].mxu0 %v488
        %v527 = vpop.f32.mrb[0].mxu0
        %v528 = vadd.f32 %v460, %v527
        %v529 = vpop.f32.mrb[0].mxu0
        %v530 = vadd.f32 %v460, %v529
        %v531 = vpop.f32.mrb[0].mxu0
        %v532 = vadd.f32 %v465, %v531
        %v533 = vpop.f32.mrb[0].mxu0
        %v534 = vadd.f32 %v465, %v533
        %535 = vmatprep.mubr.bf16.mxu0 0
        %536 = vmatmul.mubr.bf16.gmra.mrb[0].mxu0 %v491
        %v537 = vpop.f32.mrb[0].mxu0
        %v538 = vadd.f32 %v470, %v537
        %v539 = vpop.f32.mrb[0].mxu0
        %v540 = vadd.f32 %v470, %v539
        %v541 = vpop.f32.mrb[0].mxu0
        %v542 = vadd.f32 %v475, %v541
        %v543 = vpop.f32.mrb[0].mxu0
        %v544 = vadd.f32 %v475, %v543
        %545 = vdwg.mxu0
        %546 = vmatprep.subr.bf16.mxu0 %v324
        %547 = vmatpush1.bf16.msra.mxu0 %v323
        %548 = vmatprep.subr.bf16.mxu0 %v328
        %549 = vmatpush1.bf16.msra.mxu0 %v327
        %550 = vmatprep.subr.bf16.mxu0 0
        %551 = vmatpush1.bf16.msra.mxu0 0
        %552 = vmatprep.subr.bf16.mxu0 0
        %553 = vmatpush1.bf16.msra.mxu0 0
        %554 = vmatprep.subr.bf16.mxu0 0
        %555 = vmatpush1.bf16.msra.mxu0 0
        %556 = vmatprep.subr.bf16.mxu0 0
        %557 = vmatpush1.bf16.msra.mxu0 0
        %558 = vmatprep.subr.bf16.mxu0 0
        %559 = vmatpush1.bf16.msra.mxu0 0
        %560 = vmatprep.subr.bf16.mxu0 0
        %561 = vmatpush1.bf16.msra.mxu0 0
        %562 = vmatprep.subr.bf16.mxu0 0
        %563 = vmatpush1.bf16.msra.mxu0 0
        %564 = vmatprep.subr.bf16.mxu0 0
        %565 = vmatpush1.bf16.msra.mxu0 0
        %566 = vmatprep.subr.bf16.mxu0 0
        %567 = vmatpush1.bf16.msra.mxu0 0
        %568 = vmatprep.subr.bf16.mxu0 0
        %569 = vmatpush1.bf16.msra.mxu0 0
        %570 = vmatprep.subr.bf16.mxu0 0
        %571 = vmatpush1.bf16.msra.mxu0 0
        %572 = vmatprep.subr.bf16.mxu0 0
        %573 = vmatpush1.bf16.msra.mxu0 0
        %574 = vmatprep.subr.bf16.mxu0 0
        %575 = vmatpush1.bf16.msra.mxu0 0
        %576 = vmatprep.subr.bf16.mxu0 0
        %577 = vmatpush1.bf16.msra.mxu0 0
        %578 = vmatprep.mubr.bf16.mxu0 0
        %579 = vmatmul.mubr.bf16.gmra.mrb[0].mxu0 %v488
        %v580 = vpop.f32.mrb[0].mxu0
        %v581 = vadd.f32 %v460, %v580
        %v582 = vpop.f32.mrb[0].mxu0
        %v583 = vadd.f32 %v460, %v582
        %v584 = vpop.f32.mrb[0].mxu0
        %v585 = vadd.f32 %v465, %v584
        %v586 = vpop.f32.mrb[0].mxu0
        %v587 = vadd.f32 %v465, %v586
        %588 = vmatprep.mubr.bf16.mxu0 0
        %589 = vmatmul.mubr.bf16.gmra.mrb[0].mxu0 %v491
        %v590 = vpop.f32.mrb[0].mxu0
        %v591 = vadd.f32 %v470, %v590
        %v592 = vpop.f32.mrb[0].mxu0
        %v593 = vadd.f32 %v470, %v592
        %v594 = vpop.f32.mrb[0].mxu0
        %v595 = vadd.f32 %v475, %v594
        %v596 = vpop.f32.mrb[0].mxu0
        %v597 = vadd.f32 %v475, %v596
        %598 = vdwg.mxu0
        %v599 = vpack.c.bf16 %v532, %v528
        %v600 = vpack.c.bf16 %v534, %v530
        %v601 = vpack.c.bf16 %v585, %v581
        %v602 = vpack.c.bf16 %v587, %v583
        %v603 = vpack.c.bf16 %v542, %v538
        %v604 = vpack.c.bf16 %v544, %v540
        %v605 = vpack.c.bf16 %v595, %v591
        %v606 = vpack.c.bf16 %v597, %v593
        %v615 = vunpack.c.l.b16 %v599
        %v616 = vunpack.c.l.b16 %v600
        %v617 = vunpack.c.l.b16 %v601
        %v618 = vunpack.c.l.b16 %v602
        %v619 = vunpack.c.h.b16 %v599
        %v620 = vunpack.c.h.b16 %v600
        %v621 = vunpack.c.h.b16 %v601
        %v622 = vunpack.c.h.b16 %v602
        %v623 = vunpack.c.l.b16 %v603
        %v624 = vunpack.c.l.b16 %v604
        %v625 = vunpack.c.l.b16 %v605
        %v626 = vunpack.c.l.b16 %v606
        %v627 = vunpack.c.h.b16 %v603
        %v628 = vunpack.c.h.b16 %v604
        %v629 = vunpack.c.h.b16 %v605
        %v630 = vunpack.c.h.b16 %v606
        %v631 = vpack.c.b16 %v616, %v615
        %v632 = vpack.c.b16 %v618, %v617
        %v633 = vpack.c.b16 %v620, %v619
        %v634 = vpack.c.b16 %v622, %v621
        %v635 = vpack.c.b16 %v624, %v623
        %v636 = vpack.c.b16 %v626, %v625
        %v637 = vpack.c.b16 %v628, %v627
        %v638 = vpack.c.b16 %v630, %v629
        %647 = vst [vmem:[%s300] sm:$0xff] %v631
        %648 = vst [vmem:[%s300 + $0x8] sm:$0xff] %v632
        %649 = vst [vmem:[%s300 + $0x10] sm:$0xff] %v633
        %650 = vst [vmem:[%s300 + $0x18] sm:$0xff] %v634
        %651 = vst [vmem:[%s300 + $0x20] sm:$0xff] %v635
        %652 = vst [vmem:[%s300 + $0x28] sm:$0xff] %v636
        %653 = vst [vmem:[%s300 + $0x30] sm:$0xff] %v637
        %654 = vst [vmem:[%s300 + $0x38] sm:$0xff] %v638
        %s655 = sand.u32 %s161, 1
        %s656 = scalar_lea.sflag [#allocation4], %s655
        %s657 = sand.u32 %s161, 1
        %s658 = smul.addr %s657, 8
        %s659 = scalar_lea.vmem [#allocation5], %s658
        %s660 = sand.u32 %s189, 1
        %s661 = scalar_lea.sflag [#allocation7], %s660
        %s662 = sand.u32 %s189, 1
        %s663 = smul.addr %s662, 64
        %s664 = scalar_lea.vmem [#allocation6], %s663
        // Predicated region
        $region45: #{tpu_custom_call.1} parent=39 // pred_check
          %p665 = pneg %p171
        $region46: #{tpu_custom_call.1} parent=39 // pred_check_branch
          %667 = sbr.rel (%p665) target = $region48
        $region47: #{tpu_custom_call.1} parent=39 // pred_region
          %s668 = smul.u32 4, %s32
          %s670 = ssub.s32 128, 128
          %671 = vsyncadd %s656, %s670
          %s672 = smul.addr %s31, 4
          %s673 = sadd.s32 %s668, %s672
          %s674 = smul.addr %s673, 32
          %s675 = scalar_lea.hbm %s5, %s674
          %s677 = sshll.u32 %s659, 4
          %s678 = int_to_ptr.vmem [resolvable:$true] %s677
          %680 = dma.vmem_to_hbm [thread:$0]  %s678, 128, %s675, %s656
        $region48: #{tpu_custom_call.1} parent=39 // pred_fallthru
          _
        // Predicated region
        $region49: #{tpu_custom_call.1} parent=39 // pred_check
          %p681 = pneg %p199
        $region50: #{tpu_custom_call.1} parent=39 // pred_check_branch
          %683 = sbr.rel (%p681) target = $region52
        $region51: #{tpu_custom_call.1} parent=39 // pred_region
          %s684 = smul.u32 4, %s32
          %s686 = ssub.s32 1024, 1024
          %687 = vsyncadd %s661, %s686
          %s688 = smul.addr %s31, 16
          %s689 = sadd.s32 %s684, %s688
          %s690 = smul.addr %s689, 64
          %s691 = scalar_lea.hbm %s6, %s690
          %s692 = sshll.u32 %s664, 4
          %s693 = int_to_ptr.vmem [resolvable:$true] %s692
          %698 = dma.vmem_to_hbm [thread:$0]  %s693, 1024, %s691, %s661, 256, 256, 16
        $region52: #{tpu_custom_call.1} parent=39 // pred_fallthru
          _
      $region40: #{tpu_custom_call.1} parent=5 // pred_fallthru
        _
      %p699 = scmp.le.s32.totalorder 2, %s22
      // Predicated region
      $region53: #{tpu_custom_call.1} parent=5 // pred_check
        %p700 = pneg %p699
      $region54: #{tpu_custom_call.1} parent=5 // pred_check_branch
        %702 = sbr.rel (%p700) target = $region56
      $region55: #{tpu_custom_call.1} parent=5 // pred_region
        %s703 = ssub.s32 %s22, 2
        // Predicated region
        $region57: #{tpu_custom_call.1} parent=55 // pred_check
          %p704 = pneg %p177
        $region58: #{tpu_custom_call.1} parent=55 // pred_check_branch
          %706 = sbr.rel (%p704) target = $region60
        $region59: #{tpu_custom_call.1} parent=55 // pred_region
          %s707 = sand.u32 %s162, 1
          %s708 = scalar_lea.sflag [#allocation4], %s707
          %s709 = sand.u32 %s162, 1
          %s710 = smul.addr %s709, 8
          %s711 = scalar_lea.vmem [#allocation5], %s710
          %712 = dma.done %s708, 128
        $region60: #{tpu_custom_call.1} parent=55 // pred_fallthru
          _
        // Predicated region
        $region61: #{tpu_custom_call.1} parent=55 // pred_check
          %p713 = pneg %p205
        $region62: #{tpu_custom_call.1} parent=55 // pred_check_branch
          %715 = sbr.rel (%p713) target = $region64
        $region63: #{tpu_custom_call.1} parent=55 // pred_region
          %s716 = sand.u32 %s190, 1
          %s717 = scalar_lea.sflag [#allocation7], %s716
          %s718 = sand.u32 %s190, 1
          %s719 = smul.addr %s718, 64
          %s720 = scalar_lea.vmem [#allocation6], %s719
          %721 = dma.done %s717, 1024
        $region64: #{tpu_custom_call.1} parent=55 // pred_fallthru
          _
      $region56: #{tpu_custom_call.1} parent=5 // pred_fallthru
        _
    $region6: #{tpu_custom_call.1} parent=1 // loop_footer
      %s26 = sadd.s32 1, %s22
    $region7: #{tpu_custom_call.1} parent=1 // loop_footer_branch
      %21 = sbr.rel target = $region3
    $region8: #{tpu_custom_call.1} parent=1 // loop_exit
      _
    %722 = vsyncpa [#allocation3], 1
    %s723 = scalar_lea.sflag [#allocation3], 1
    %724 = vsyncpa %s723, 1
    %725 = vsyncpa [#allocation4], 1
    %s726 = scalar_lea.sflag [#allocation4], 1
    %727 = vsyncpa %s726, 1
    %728 = vsyncpa [#allocation7], 1
    %s729 = scalar_lea.sflag [#allocation7], 1
    %730 = vsyncpa %s729, 1

</llo_original>
